<compile_context>
chip_gen: v5e
topology: v5e:2x2
jax: 0.10.0
libtpu: 0.0.40
codegen_flags: <defaults>
</compile_context>

<pallas_src>
import functools

import jax
import jax.numpy as jnp
import numpy as np
from jax.experimental import pallas as pl
from jax.experimental.pallas import tpu as pltpu


def joiner_kernel(enc_ref, dec_ref, w1e_ref, w1d_ref, b1_ref, w2_ref, out_ref,
                  h_ref, a_ref, *, block_v, w2_resident):
    u_idx = pl.program_id(2)
    v_idx = pl.program_id(3)

    # h = enc_tile @ W1_enc : depends only on (b, t) -> compute once per T-tile.
    @pl.when((u_idx == 0) & (v_idx == 0))
    def _():
        h_ref[...] = jnp.dot(enc_ref[0], w1e_ref[...],
                             preferred_element_type=jnp.float32)

    # Full tanh activation cache: depends only on (b, t, u) -> compute once per U-tile,
    # reuse across every V slab (broadcast-add, f32 tanh, cast, sublane collapse all
    # happen exactly once per output tile instead of V/tv times).
    @pl.when(v_idx == 0)
    def _():
        g = (jnp.dot(dec_ref[0], w1d_ref[...],
                     preferred_element_type=jnp.float32)
             + b1_ref[...])                                  # (tu, C), f32
        z = h_ref[...][:, None, :] + g[None, :, :]           # (tt, tu, C), f32
        a = jnp.tanh(z).astype(a_ref.dtype)                  # tanh in f32, cast for MXU
        a_ref[...] = a.reshape(a_ref.shape)                  # (tt*tu, C) sublane collapse

    # Inner V step: one MXU matmul + lane-dense store.
    if w2_resident:
        start = v_idx * block_v
        if block_v % 128 == 0:
            start = pl.multiple_of(start, 128)
        w2_slab = w2_ref[:, pl.ds(start, block_v)]
    else:
        w2_slab = w2_ref[...]

    out = jnp.dot(a_ref[...], w2_slab, preferred_element_type=jnp.float32)
    _, tt, tu, tv = out_ref.shape
    out_ref[0] = out.reshape(tt, tu, tv).astype(out_ref.dtype)


def joiner_forward(enc_out, dec_out, w1, b1, w2, *,
                   block_t=32, block_u=32, block_v=512,
                   compute_dtype=jnp.bfloat16, out_dtype=None,
                   w2_resident=None, w2_resident_max_bytes=8 * 1024 * 1024):
    """
    enc_out: (B, T, C)   encoder output
    dec_out: (B, U, C)   prediction-network output
    w1: (2C, C)  first linear weight, (in, out) layout
    b1: (C,)     first linear bias
    w2: (C, V)   second linear weight, (in, out) layout, no bias
    returns: (B, T, U, V)
    """
    B, T, C = enc_out.shape
    Bd, U, Cd = dec_out.shape
    assert Bd == B and Cd == C
    assert w1.shape == (2 * C, C)
    assert b1.shape == (C,)
    assert w2.shape[0] == C
    V = w2.shape[1]

    if out_dtype is None:
        # Production tip: pass out_dtype=jnp.bfloat16 — the kernel is output-write
        # bound, so halving output bytes is the single biggest wall-time lever.
        out_dtype = enc_out.dtype

    tt = min(block_t, T)
    tu = min(block_u, U)
    tv = min(block_v, V)

    # BlockSpec (8, 128) layout constraints on the blocked dims.  For bf16 (2 rows per
    # sublane) require multiples of 16 to keep loads/collapse/stores unmasked.
    sub = 8 if jnp.dtype(compute_dtype).itemsize == 4 else 16
    assert T % tt == 0 and (tt % sub == 0 or tt == T)
    assert U % tu == 0 and (tu % sub == 0 or tu == U)
    assert V % tv == 0 and (tv % 128 == 0 or tv == V)
    # TODO(synk): for tiny vocabularies (V < 128), pad V up to 128 instead of asserting.

    w2_bytes = C * V * jnp.dtype(compute_dtype).itemsize
    if w2_resident is None:
        w2_resident = w2_bytes <= w2_resident_max_bytes

    # Split the concat-linear:  [enc | dec] @ W1 == enc @ W1e + dec @ W1d.
    # TODO(synk): in decode/beam-search loops, pre-cast and persist these bf16 weights
    # outside this wrapper so the f32->bf16 casts are not re-run per decoding step.
    w1e = w1[:C, :].astype(compute_dtype)
    w1d = w1[C:, :].astype(compute_dtype)
    b1_2d = b1.reshape(1, C).astype(jnp.float32)
    w2_c = w2.astype(compute_dtype)
    enc_c = enc_out.astype(compute_dtype)
    dec_c = dec_out.astype(compute_dtype)

    grid = (B, T // tt, U // tu, V // tv)

    if w2_resident:
        # Constant block index -> W2 is DMA'd into VMEM once and reused for the whole
        # grid; the kernel slices (C, tv) slabs out of it with pl.ds.
        w2_spec = pl.BlockSpec((C, V), lambda b, t, u, v: (0, 0))
    else:
        # Stream W2 by V-slab (large vocabularies, e.g. V >= ~32k bf16 on v7x).
        w2_spec = pl.BlockSpec((C, tv), lambda b, t, u, v: (0, v))

    kernel = functools.partial(joiner_kernel, block_v=tv, w2_resident=w2_resident)

    return pl.pallas_call(
        kernel,
        out_shape=jax.ShapeDtypeStruct((B, T, U, V), out_dtype),
        grid_spec=pltpu.PrefetchScalarGridSpec(
            num_scalar_prefetch=0,
            grid=grid,
            in_specs=[
                pl.BlockSpec((1, tt, C), lambda b, t, u, v: (b, t, 0)),
                pl.BlockSpec((1, tu, C), lambda b, t, u, v: (b, u, 0)),
                pl.BlockSpec((C, C), lambda b, t, u, v: (0, 0)),
                pl.BlockSpec((C, C), lambda b, t, u, v: (0, 0)),
                pl.BlockSpec((1, C), lambda b, t, u, v: (0, 0)),
                w2_spec,
            ],
            out_specs=pl.BlockSpec((1, tt, tu, tv),
                                   lambda b, t, u, v: (b, t, u, v)),
            scratch_shapes=[
                pltpu.VMEM((tt, C), jnp.float32),        # cached h (per T-tile)
                pltpu.VMEM((tt * tu, C), compute_dtype), # cached tanh activation (per U-tile)
            ],
        ),
        compiler_params=pltpu.CompilerParams(
            # B / T-tile axes may be sharded across TensorCores (v7x megacore): ensure
            # B*(T/tt) >= 2 there.  The u/v axes must stay "arbitrary" because the
            # h / tanh caches are written under pl.when guards on those axes.
            dimension_semantics=("parallel", "parallel", "arbitrary", "arbitrary"),
            # Safe under v7x's 64 MiB physical VMEM; raise to ~96 MiB on v5e/v6e for
            # even larger tiles / resident W2.
            vmem_limit_bytes=48 * 1024 * 1024,
        ),
    )(enc_c, dec_c, w1e, w1d, b1_2d, w2_c)


def joiner_reference(enc_out, dec_out, w1, b1, w2):
    B, T, C = enc_out.shape
    _, U, _ = dec_out.shape
    enc_bc = jnp.broadcast_to(enc_out[:, :, None, :], (B, T, U, C))
    dec_bc = jnp.broadcast_to(dec_out[:, None, :, :], (B, T, U, C))
    x = jnp.concatenate([enc_bc, dec_bc], axis=-1)          # (B, T, U, 2C)
    h = jnp.tanh(x @ w1 + b1)                                # (B, T, U, C)
    return h @ w2                                            # (B, T, U, V)


if __name__ == "__main__":
    # Small but MXU/layout-aligned shapes: C and V multiples of 128, T/U multiples of
    # the tile sizes used below, so all tiling/caching paths are exercised.
    B, T, U, C, V = 2, 32, 32, 128, 512

    key = jax.random.PRNGKey(0)
    k_enc, k_dec, k_w1, k_b1, k_w2 = jax.random.split(key, 5)

    enc_out = jax.random.normal(k_enc, (B, T, C), dtype=jnp.float32)
    dec_out = jax.random.normal(k_dec, (B, U, C), dtype=jnp.float32)

    # Parameter shapes match nn.Linear(2C, C) / nn.Linear(C, V, bias=False), (in, out) layout.
    w1 = jax.random.normal(k_w1, (2 * C, C), dtype=jnp.float32) * 0.05
    b1 = jax.random.normal(k_b1, (C,), dtype=jnp.float32) * 0.05
    w2 = jax.random.normal(k_w2, (C, V), dtype=jnp.float32) * 0.05

    ref = jax.block_until_ready(joiner_reference(enc_out, dec_out, w1, b1, w2))

    # (a) Exact-precision path (f32 operands), multi-tile grid, resident W2: tight check.
    out_f32_res = jax.block_until_ready(
        joiner_forward(enc_out, dec_out, w1, b1, w2,
                       block_t=16, block_u=16, block_v=256,
                       compute_dtype=jnp.float32))
    np.testing.assert_allclose(np.asarray(out_f32_res), np.asarray(ref),
                               rtol=1e-5, atol=1e-5)

    # (b) Exact-precision path with the streaming-W2 fallback (large-vocab code path).
    out_f32_stream = jax.block_until_ready(
        joiner_forward(enc_out, dec_out, w1, b1, w2,
                       block_t=16, block_u=16, block_v=256,
                       compute_dtype=jnp.float32, w2_resident=False))
    np.testing.assert_allclose(np.asarray(out_f32_stream), np.asarray(ref),
                               rtol=1e-5, atol=1e-5)

    # (c) Performance path: bf16 operands, bf16 output, big default tiles: loose check.
    out_bf16 = jax.block_until_ready(
        joiner_forward(enc_out, dec_out, w1, b1, w2,
                       compute_dtype=jnp.bfloat16, out_dtype=jnp.bfloat16))
    np.testing.assert_allclose(np.asarray(out_bf16, dtype=np.float32),
                               np.asarray(ref), rtol=4e-2, atol=4e-2)

    print("KERNEL_OK")
</pallas_src>

<mosaic_0001>
module attributes {stable_mosaic.version = 11 : i64} {
  func.func @joiner_kernel(%arg0: i32, %arg1: i32, %arg2: i32, %arg3: i32, %arg4: memref<1x16x128xf32, #tpu.memory_space<vmem>>, %arg5: memref<1x16x128xf32, #tpu.memory_space<vmem>>, %arg6: memref<128x128xf32, #tpu.memory_space<vmem>>, %arg7: memref<128x128xf32, #tpu.memory_space<vmem>>, %arg8: memref<1x128xf32, #tpu.memory_space<vmem>>, %arg9: memref<128x512xf32, #tpu.memory_space<vmem>>, %arg10: memref<1x16x16x256xf32, #tpu.memory_space<vmem>>, %arg11: memref<16x128xf32, #tpu.memory_space<vmem>>, %arg12: memref<256x128xf32, #tpu.memory_space<vmem>>) attributes {dimension_semantics = [#tpu.dimension_semantics<parallel>, #tpu.dimension_semantics<parallel>, #tpu.dimension_semantics<arbitrary>, #tpu.dimension_semantics<arbitrary>], iteration_bounds = array<i64: 2, 2, 2, 2>, scalar_prefetch = 0 : i64, scratch_operands = 2 : i64, tpu.core_type = #tpu.core_type<tc>, window_params = [{transform_indices = @transform_0, window_bounds = array<i64: 1, 16, 128>}, {transform_indices = @transform_1, window_bounds = array<i64: 1, 16, 128>}, {pipeline_mode = #tpu.pipeline_mode<synchronous>, transform_indices = @transform_2, window_bounds = array<i64: 128, 128>}, {pipeline_mode = #tpu.pipeline_mode<synchronous>, transform_indices = @transform_3, window_bounds = array<i64: 128, 128>}, {pipeline_mode = #tpu.pipeline_mode<synchronous>, transform_indices = @transform_4, window_bounds = array<i64: 1, 128>}, {pipeline_mode = #tpu.pipeline_mode<synchronous>, transform_indices = @transform_5, window_bounds = array<i64: 128, 512>}, {transform_indices = @transform_6, window_bounds = array<i64: 1, 16, 16, 256>}]} {
    %c0_i32 = arith.constant 0 : i32
    %0 = arith.cmpi eq, %arg2, %c0_i32 : i32
    %c0_i32_0 = arith.constant 0 : i32
    %1 = arith.cmpi eq, %arg3, %c0_i32_0 : i32
    %2 = arith.andi %0, %1 : i1
    %3 = arith.extui %2 : i1 to i32
    %c0_i32_1 = arith.constant 0 : i32
    %4 = arith.cmpi ne, %3, %c0_i32_1 : i32
    scf.if %4 {
      %c0_10 = arith.constant 0 : index
      %c0_11 = arith.constant 0 : index
      %c0_12 = arith.constant 0 : index
      %18 = vector.load %arg4[%c0_10, %c0_11, %c0_12] : memref<1x16x128xf32, #tpu.memory_space<vmem>>, vector<1x16x128xf32>
      %19 = vector.shape_cast %18 : vector<1x16x128xf32> to vector<16x128xf32>
      %c0_13 = arith.constant 0 : index
      %c0_14 = arith.constant 0 : index
      %20 = vector.load %arg6[%c0_13, %c0_14] : memref<128x128xf32, #tpu.memory_space<vmem>>, vector<128x128xf32>
      %cst_15 = arith.constant dense<0.000000e+00> : vector<16x128xf32>
      %21 = tpu.matmul %19, %20, %cst_15 {dimension_numbers = #tpu.dot_dimension_numbers<[1], [0], [0], [1], [0, 0, 1, 1], [], []>} : vector<16x128xf32>, vector<128x128xf32>, vector<16x128xf32> -> vector<16x128xf32>
      %c0_16 = arith.constant 0 : index
      %c0_17 = arith.constant 0 : index
      %22 = vector.load %arg11[%c0_16, %c0_17] : memref<16x128xf32, #tpu.memory_space<vmem>>, vector<16x128xf32>
      tpu.vector_store %arg11[%c0_16, %c0_17], %21 {strides = array<i32>} : memref<16x128xf32, #tpu.memory_space<vmem>>, vector<16x128xf32>,
    } else {
    }
    %c0_i32_2 = arith.constant 0 : i32
    %5 = arith.cmpi eq, %arg3, %c0_i32_2 : i32
    %6 = arith.extui %5 : i1 to i32
    %c0_i32_3 = arith.constant 0 : i32
    %7 = arith.cmpi ne, %6, %c0_i32_3 : i32
    scf.if %7 {
      %c0_10 = arith.constant 0 : index
      %c0_11 = arith.constant 0 : index
      %c0_12 = arith.constant 0 : index
      %18 = vector.load %arg5[%c0_10, %c0_11, %c0_12] : memref<1x16x128xf32, #tpu.memory_space<vmem>>, vector<1x16x128xf32>
      %19 = vector.shape_cast %18 : vector<1x16x128xf32> to vector<16x128xf32>
      %c0_13 = arith.constant 0 : index
      %c0_14 = arith.constant 0 : index
      %20 = vector.load %arg7[%c0_13, %c0_14] : memref<128x128xf32, #tpu.memory_space<vmem>>, vector<128x128xf32>
      %cst_15 = arith.constant dense<0.000000e+00> : vector<16x128xf32>
      %21 = tpu.matmul %19, %20, %cst_15 {dimension_numbers = #tpu.dot_dimension_numbers<[1], [0], [0], [1], [0, 0, 1, 1], [], []>} : vector<16x128xf32>, vector<128x128xf32>, vector<16x128xf32> -> vector<16x128xf32>
      %c0_16 = arith.constant 0 : index
      %c0_17 = arith.constant 0 : index
      %22 = vector.load %arg8[%c0_16, %c0_17] : memref<1x128xf32, #tpu.memory_space<vmem>>, vector<1x128xf32>
      %23 = vector.broadcast %22 : vector<1x128xf32> to vector<16x128xf32>
      %24 = arith.addf %21, %23 : vector<16x128xf32>
      %c0_18 = arith.constant 0 : index
      %c0_19 = arith.constant 0 : index
      %25 = vector.load %arg11[%c0_18, %c0_19] : memref<16x128xf32, #tpu.memory_space<vmem>>, vector<16x128xf32>
      %26 = vector.shape_cast %25 : vector<16x128xf32> to vector<16x1x128xf32>
      %27 = vector.shape_cast %24 : vector<16x128xf32> to vector<1x16x128xf32>
      %28 = vector.broadcast %26 : vector<16x1x128xf32> to vector<16x16x128xf32>
      %29 = vector.broadcast %27 : vector<1x16x128xf32> to vector<16x16x128xf32>
      %30 = arith.addf %28, %29 : vector<16x16x128xf32>
      %31 = math.tanh %30 : vector<16x16x128xf32>
      %32 = vector.shape_cast %31 : vector<16x16x128xf32> to vector<256x128xf32>
      %c0_20 = arith.constant 0 : index
      %c0_21 = arith.constant 0 : index
      %33 = vector.load %arg12[%c0_20, %c0_21] : memref<256x128xf32, #tpu.memory_space<vmem>>, vector<256x128xf32>
      tpu.vector_store %arg12[%c0_20, %c0_21], %32 {strides = array<i32>} : memref<256x128xf32, #tpu.memory_space<vmem>>, vector<256x128xf32>,
    } else {
    }
    %c256_i32 = arith.constant 256 : i32
    %8 = arith.muli %arg3, %c256_i32 : i32
    %9 = tpu.assume_multiple %8, 128 : i32
    %c0 = arith.constant 0 : index
    %10 = arith.index_cast %9 : i32 to index
    %11 = vector.load %arg9[%c0, %10] : memref<128x512xf32, #tpu.memory_space<vmem>>, vector<128x256xf32>
    %c0_4 = arith.constant 0 : index
    %c0_5 = arith.constant 0 : index
    %12 = vector.load %arg12[%c0_4, %c0_5] : memref<256x128xf32, #tpu.memory_space<vmem>>, vector<256x128xf32>
    %cst = arith.constant dense<0.000000e+00> : vector<256x256xf32>
    %13 = tpu.matmul %12, %11, %cst {dimension_numbers = #tpu.dot_dimension_numbers<[1], [0], [0], [1], [0, 0, 1, 1], [], []>} : vector<256x128xf32>, vector<128x256xf32>, vector<256x256xf32> -> vector<256x256xf32>
    %14 = vector.shape_cast %13 : vector<256x256xf32> to vector<16x16x256xf32>
    %c0_6 = arith.constant 0 : index
    %c0_7 = arith.constant 0 : index
    %c0_8 = arith.constant 0 : index
    %c0_9 = arith.constant 0 : index
    %15 = vector.load %arg10[%c0_6, %c0_7, %c0_8, %c0_9] : memref<1x16x16x256xf32, #tpu.memory_space<vmem>>, vector<1x16x16x256xf32>
    %16 = vector.shape_cast %15 : vector<1x16x16x256xf32> to vector<16x16x256xf32>
    %17 = vector.shape_cast %14 : vector<16x16x256xf32> to vector<1x16x16x256xf32>
    tpu.vector_store %arg10[%c0_6, %c0_7, %c0_8, %c0_9], %17 {strides = array<i32>} : memref<1x16x16x256xf32, #tpu.memory_space<vmem>>, vector<1x16x16x256xf32>,
    return
  }
  func.func @transform_0(%arg0: i32, %arg1: i32, %arg2: i32, %arg3: i32) -> (i32, i32, i32) {
    %c0_i32 = arith.constant 0 : i32
    %c0_i32_0 = arith.constant 0 : i32
    return %arg0, %arg1, %c0_i32 : i32, i32, i32
  }
  func.func @transform_1(%arg0: i32, %arg1: i32, %arg2: i32, %arg3: i32) -> (i32, i32, i32) {
    %c0_i32 = arith.constant 0 : i32
    %c0_i32_0 = arith.constant 0 : i32
    return %arg0, %arg2, %c0_i32 : i32, i32, i32
  }
  func.func @transform_2(%arg0: i32, %arg1: i32, %arg2: i32, %arg3: i32) -> (i32, i32) {
    %c0_i32 = arith.constant 0 : i32
    %c0_i32_0 = arith.constant 0 : i32
    %c0_i32_1 = arith.constant 0 : i32
    return %c0_i32, %c0_i32_0 : i32, i32
  }
  func.func @transform_3(%arg0: i32, %arg1: i32, %arg2: i32, %arg3: i32) -> (i32, i32) {
    %c0_i32 = arith.constant 0 : i32
    %c0_i32_0 = arith.constant 0 : i32
    %c0_i32_1 = arith.constant 0 : i32
    return %c0_i32, %c0_i32_0 : i32, i32
  }
  func.func @transform_4(%arg0: i32, %arg1: i32, %arg2: i32, %arg3: i32) -> (i32, i32) {
    %c0_i32 = arith.constant 0 : i32
    %c0_i32_0 = arith.constant 0 : i32
    %c0_i32_1 = arith.constant 0 : i32
    return %c0_i32, %c0_i32_0 : i32, i32
  }
  func.func @transform_5(%arg0: i32, %arg1: i32, %arg2: i32, %arg3: i32) -> (i32, i32) {
    %c0_i32 = arith.constant 0 : i32
    %c0_i32_0 = arith.constant 0 : i32
    %c0_i32_1 = arith.constant 0 : i32
    return %c0_i32, %c0_i32_0 : i32, i32
  }
  func.func @transform_6(%arg0: i32, %arg1: i32, %arg2: i32, %arg3: i32) -> (i32, i32, i32, i32) {
    %c0_i32 = arith.constant 0 : i32
    return %arg0, %arg1, %arg2, %arg3 : i32, i32, i32, i32
  }
}

</mosaic_0001>

<llo_original>
// kernel: tpu_custom_call.1
$region0: #{tpu_custom_call.1}
  #allocation0 [shape = 'u32[]', space=smem, size = 0x4, offset = 0x4, fixed_abs, tag = 'smem constant byte address 0x4 - core index']
  #allocation1 [shape = 'u32[72,128]{1,0:T(1,128)}', space=vmem, size = 0x9000, scoped, tag = 'internal scratch']
  #allocation2 [shape = 'f32[16,128]{1,0:T(8,128)}', space=vmem, size = 0x2000, scoped, tag = 'scratch operand']
  #allocation3 [shape = 'f32[256,128]{1,0:T(8,128)}', space=vmem, size = 0x20000, scoped, tag = 'scratch operand']
  #allocation16 [shape = 's32[]', space=sflag, size = 0x4, offset = 0, fixed_abs, tag = 'sflag constant byte address 0x0 - dummy sync flag']
  %s0 = inlined_call_operand.hbm [shape: f32[2,32,128], index: 0, kind: input, shape index: {}]
  %s1 = inlined_call_operand.hbm [shape: f32[2,32,128], index: 1, kind: input, shape index: {}]
  %s2 = inlined_call_operand.hbm [shape: f32[128,128], index: 2, kind: input, shape index: {}]
  %s3 = inlined_call_operand.hbm [shape: f32[128,128], index: 3, kind: input, shape index: {}]
  %s4 = inlined_call_operand.hbm [shape: f32[1,128], index: 4, kind: input, shape index: {}]
  %s5 = inlined_call_operand.hbm [shape: f32[128,512], index: 5, kind: input, shape index: {}]
  %s6 = inlined_call_operand.hbm [shape: f32[2,32,32,512], index: 6, kind: output, shape index: {}]
  %s7 = sld [smem:[#allocation0]]
  $region89: #{tpu_custom_call.1} parent=0
    _
  %s9 = ssub.s32 1, %s7
  %s10 = scalar_select 0, %s9, %s7
  $region1: #{tpu_custom_call.1} parent=0
    #allocation4 [shape = 'u8[16384]{0}', space=vmem, size = 0x4000, scoped, tag = 'input window, operand 0']
    #allocation5 [shape = 's32[2]{0}', space=sflag, size = 0x8, scoped, tag = 'scoped memory for tpu_custom_call.1']
    #allocation6 [shape = 's32[2]{0}', space=sflag, size = 0x8, scoped, tag = 'scoped memory for tpu_custom_call.1']
    #allocation7 [shape = 'u8[16384]{0}', space=vmem, size = 0x4000, scoped, tag = 'input window, operand 1']
    #allocation8 [shape = 's32[2]{0}', space=sflag, size = 0x8, scoped, tag = 'scoped memory for tpu_custom_call.1']
    #allocation9 [shape = 'u8[65536]{0}', space=vmem, size = 0x10000, scoped, tag = 'input window, operand 2, single buffered']
    #allocation10 [shape = 'u8[65536]{0}', space=vmem, size = 0x10000, scoped, tag = 'input window, operand 3, single buffered']
    #allocation11 [shape = 's32[1]{0}', space=sflag, size = 0x4, scoped, tag = 'scoped memory for tpu_custom_call.1']
    #allocation12 [shape = 'u8[512]{0}', space=vmem, size = 0x400, scoped, tag = 'input window, operand 4, single buffered']
    #allocation13 [shape = 'u8[262144]{0}', space=vmem, size = 0x40000, scoped, tag = 'input window, operand 5, single buffered']
    #allocation14 [shape = 's32[1]{0}', space=sflag, size = 0x4, scoped, tag = 'scoped memory for tpu_custom_call.1']
    #allocation15 [shape = 'u8[524288]{0}', space=vmem, size = 0x80000, scoped, tag = 'output window, operand 0']
    %11 = vsyncpa [#allocation5], 0
    %s12 = scalar_lea.sflag [#allocation5], 1
    %13 = vsyncpa %s12, 0
    %14 = vsyncpa [#allocation8], 0
    %s15 = scalar_lea.sflag [#allocation8], 1
    %16 = vsyncpa %s15, 0
    %17 = vsyncpa [#allocation11], 0
    %18 = vsyncpa [#allocation14], 0
    %19 = vsyncpa [#allocation6], 0
    %s20 = scalar_lea.sflag [#allocation6], 1
    %21 = vsyncpa %s20, 0
    loop: start=0, step=1, limit=18
    $region2: #{tpu_custom_call.1} parent=1 // loop_pre_header
      _
    $region3: #{tpu_custom_call.1} parent=1 // loop_header
      %s23 = sphi 0, %s27
      %p24 = scmp.ge.s32.totalorder %s23, 18
      %s30 = sphi 0, %s56
      %s31 = sphi 0, %s52
      %s32 = sphi 0, %s48
      %s33 = sphi 0, %s44
      %s34 = sphi 0, %s30
      %s35 = sphi 0, %s31
      %s36 = sphi 0, %s32
      %s37 = sphi 0, %s33
      %s38 = sphi 0, %s34
      %s39 = sphi 0, %s35
      %s40 = sphi 0, %s36
      %s41 = sphi 0, %s37
      %s61 = sphi 0, %s63
      %s64 = sphi 0, %s61
      %s65 = sphi 0, %s64
      %s81 = sphi 0, %s65
      %s89 = sphi 0, %s91
      %s92 = sphi 0, %s89
      %s93 = sphi 0, %s92
      %s109 = sphi 0, %s93
      %s113 = sphi 0, %s113
      %s115 = sphi 0, %s113
      %s116 = sphi 0, %s115
      %s130 = sphi 0, %s116
      %s134 = sphi 0, %s134
      %s136 = sphi 0, %s134
      %s137 = sphi 0, %s136
      %s151 = sphi 0, %s137
      %s155 = sphi 0, %s155
      %s157 = sphi 0, %s155
      %s158 = sphi 0, %s157
      %s172 = sphi 0, %s158
      %s176 = sphi 0, %s176
      %s178 = sphi 0, %s176
      %s179 = sphi 0, %s178
      %s193 = sphi 0, %s179
      %s205 = sphi 0, %s207
      %s208 = sphi 0, %s205
      %s209 = sphi 0, %s208
      %s225 = sphi 0, %s209
    $region4: #{tpu_custom_call.1} parent=1 // loop_header_branch
      %26 = sbr.rel (%p24) target = $region8
    $region5: #{tpu_custom_call.1} parent=1 // loop_body
      %s28 = ssub.s32 %s23, 1
      %s29 = ssub.s32 %s23, 2
      %s42 = sadd.s32 1, %s33
      %p43 = scmp.ge.s32.totalorder %s42, 2
      %s44 = scalar_select %p43, 0, %s42
      %s45 = sadd.s32 1, %s32
      %s46 = scalar_select %p43, %s45, %s32
      %p47 = scmp.ge.s32.totalorder %s46, 2
      %s48 = scalar_select %p47, 0, %s46
      %s49 = sadd.s32 1, %s31
      %s50 = scalar_select %p47, %s49, %s31
      %p51 = scmp.ge.s32.totalorder %s50, 2
      %s52 = scalar_select %p51, 0, %s50
      %s53 = sadd.s32 1, %s30
      %s54 = scalar_select %p51, %s53, %s30
      %p55 = scmp.ge.s32.totalorder %s54, 2
      %s56 = scalar_select %p55, 0, %s54
      %s57 = ssub.s32 %s30, %s56
      %s58 = ssub.s32 %s31, %s52
      %s59 = sor.u32 %s57, %s58
      %p60 = scmp.eq.s32.totalorder %s59, 0
      %s62 = sadd.s32 %s61, 1
      %s63 = scalar_select %p60, %s61, %s62
      %p66 = pneg %p60
      %p67 = scmp.eq.s32.totalorder %s23, 15
      %p68 = por %p66, %p67
      %p69 = scmp.ne.s32.totalorder %s61, %s64
      %p70 = scmp.eq.s32.totalorder %s23, 0
      %p71 = por %p69, %p70
      %p72 = scmp.ne.s32.totalorder %s61, %s64
      %p73 = scmp.eq.s32.totalorder %s28, 15
      %p74 = por %p72, %p73
      %p75 = scmp.ne.s32.totalorder %s64, %s65
      %p76 = scmp.eq.s32.totalorder %s28, 0
      %p77 = por %p75, %p76
      %p78 = scmp.ne.s32.totalorder %s64, %s65
      %p79 = scmp.eq.s32.totalorder %s29, 15
      %p80 = por %p78, %p79
      %p82 = scmp.ne.s32.totalorder %s65, %s81
      %p83 = scmp.eq.s32.totalorder %s29, 0
      %p84 = por %p82, %p83
      %s85 = ssub.s32 %s30, %s56
      %s86 = ssub.s32 %s32, %s48
      %s87 = sor.u32 %s85, %s86
      %p88 = scmp.eq.s32.totalorder %s87, 0
      %s90 = sadd.s32 %s89, 1
      %s91 = scalar_select %p88, %s89, %s90
      %p94 = pneg %p88
      %p95 = scmp.eq.s32.totalorder %s23, 15
      %p96 = por %p94, %p95
      %p97 = scmp.ne.s32.totalorder %s89, %s92
      %p98 = scmp.eq.s32.totalorder %s23, 0
      %p99 = por %p97, %p98
      %p100 = scmp.ne.s32.totalorder %s89, %s92
      %p101 = scmp.eq.s32.totalorder %s28, 15
      %p102 = por %p100, %p101
      %p103 = scmp.ne.s32.totalorder %s92, %s93
      %p104 = scmp.eq.s32.totalorder %s28, 0
      %p105 = por %p103, %p104
      %p106 = scmp.ne.s32.totalorder %s92, %s93
      %p107 = scmp.eq.s32.totalorder %s29, 15
      %p108 = por %p106, %p107
      %p110 = scmp.ne.s32.totalorder %s93, %s109
      %p111 = scmp.eq.s32.totalorder %s29, 0
      %p112 = por %p110, %p111
      %s114 = sadd.s32 %s113, 1
      %p117 = scmp.eq.s32.totalorder %s23, 15
      %p118 = scmp.ne.s32.totalorder %s113, %s115
      %p119 = scmp.eq.s32.totalorder %s23, 0
      %p120 = por %p118, %p119
      %p121 = scmp.ne.s32.totalorder %s113, %s115
      %p122 = scmp.eq.s32.totalorder %s28, 15
      %p123 = por %p121, %p122
      %p124 = scmp.ne.s32.totalorder %s115, %s116
      %p125 = scmp.eq.s32.totalorder %s28, 0
      %p126 = por %p124, %p125
      %p127 = scmp.ne.s32.totalorder %s115, %s116
      %p128 = scmp.eq.s32.totalorder %s29, 15
      %p129 = por %p127, %p128
      %p131 = scmp.ne.s32.totalorder %s116, %s130
      %p132 = scmp.eq.s32.totalorder %s29, 0
      %p133 = por %p131, %p132
      %s135 = sadd.s32 %s134, 1
      %p138 = scmp.eq.s32.totalorder %s23, 15
      %p139 = scmp.ne.s32.totalorder %s134, %s136
      %p140 = scmp.eq.s32.totalorder %s23, 0
      %p141 = por %p139, %p140
      %p142 = scmp.ne.s32.totalorder %s134, %s136
      %p143 = scmp.eq.s32.totalorder %s28, 15
      %p144 = por %p142, %p143
      %p145 = scmp.ne.s32.totalorder %s136, %s137
      %p146 = scmp.eq.s32.totalorder %s28, 0
      %p147 = por %p145, %p146
      %p148 = scmp.ne.s32.totalorder %s136, %s137
      %p149 = scmp.eq.s32.totalorder %s29, 15
      %p150 = por %p148, %p149
      %p152 = scmp.ne.s32.totalorder %s137, %s151
      %p153 = scmp.eq.s32.totalorder %s29, 0
      %p154 = por %p152, %p153
      %s156 = sadd.s32 %s155, 1
      %p159 = scmp.eq.s32.totalorder %s23, 15
      %p160 = scmp.ne.s32.totalorder %s155, %s157
      %p161 = scmp.eq.s32.totalorder %s23, 0
      %p162 = por %p160, %p161
      %p163 = scmp.ne.s32.totalorder %s155, %s157
      %p164 = scmp.eq.s32.totalorder %s28, 15
      %p165 = por %p163, %p164
      %p166 = scmp.ne.s32.totalorder %s157, %s158
      %p167 = scmp.eq.s32.totalorder %s28, 0
      %p168 = por %p166, %p167
      %p169 = scmp.ne.s32.totalorder %s157, %s158
      %p170 = scmp.eq.s32.totalorder %s29, 15
      %p171 = por %p169, %p170
      %p173 = scmp.ne.s32.totalorder %s158, %s172
      %p174 = scmp.eq.s32.totalorder %s29, 0
      %p175 = por %p173, %p174
      %s177 = sadd.s32 %s176, 1
      %p180 = scmp.eq.s32.totalorder %s23, 15
      %p181 = scmp.ne.s32.totalorder %s176, %s178
      %p182 = scmp.eq.s32.totalorder %s23, 0
      %p183 = por %p181, %p182
      %p184 = scmp.ne.s32.totalorder %s176, %s178
      %p185 = scmp.eq.s32.totalorder %s28, 15
      %p186 = por %p184, %p185
      %p187 = scmp.ne.s32.totalorder %s178, %s179
      %p188 = scmp.eq.s32.totalorder %s28, 0
      %p189 = por %p187, %p188
      %p190 = scmp.ne.s32.totalorder %s178, %s179
      %p191 = scmp.eq.s32.totalorder %s29, 15
      %p192 = por %p190, %p191
      %p194 = scmp.ne.s32.totalorder %s179, %s193
      %p195 = scmp.eq.s32.totalorder %s29, 0
      %p196 = por %p194, %p195
      %s197 = ssub.s32 %s30, %s56
      %s198 = ssub.s32 %s31, %s52
      %s199 = sor.u32 %s197, %s198
      %s200 = ssub.s32 %s32, %s48
      %s201 = sor.u32 %s199, %s200
      %s202 = ssub.s32 %s33, %s44
      %s203 = sor.u32 %s201, %s202
      %p204 = scmp.eq.s32.totalorder %s203, 0
      %s206 = sadd.s32 %s205, 1
      %s207 = scalar_select %p204, %s205, %s206
      %p210 = pneg %p204
      %p211 = scmp.eq.s32.totalorder %s23, 15
      %p212 = por %p210, %p211
      %p213 = scmp.ne.s32.totalorder %s205, %s208
      %p214 = scmp.eq.s32.totalorder %s23, 0
      %p215 = por %p213, %p214
      %p216 = scmp.ne.s32.totalorder %s205, %s208
      %p217 = scmp.eq.s32.totalorder %s28, 15
      %p218 = por %p216, %p217
      %p219 = scmp.ne.s32.totalorder %s208, %s209
      %p220 = scmp.eq.s32.totalorder %s28, 0
      %p221 = por %p219, %p220
      %p222 = scmp.ne.s32.totalorder %s208, %s209
      %p223 = scmp.eq.s32.totalorder %s29, 15
      %p224 = por %p222, %p223
      %p226 = scmp.ne.s32.totalorder %s209, %s225
      %p227 = scmp.eq.s32.totalorder %s29, 0
      %p228 = por %p226, %p227
      %p229 = scmp.le.s32.totalorder 1, %s23
      %p230 = scmp.lt.s32.totalorder %s23, 17
      %p231 = pnand %p229, %p230
      %p232 = pneg %p231
      // Predicated region
      $region9: #{tpu_custom_call.1} parent=5 // pred_check
        _
      $region10: #{tpu_custom_call.1} parent=5 // pred_check_branch
        %234 = sbr.rel (%p231) target = $region12
      $region11: #{tpu_custom_call.1} parent=5 // pred_region
        %s235 = ssub.s32 %s23, 1
        // Predicated region
        $region13: #{tpu_custom_call.1} parent=11 // pred_check
          %p236 = pneg %p126
        $region14: #{tpu_custom_call.1} parent=11 // pred_check_branch
          %238 = sbr.rel (%p236) target = $region16
        $region15: #{tpu_custom_call.1} parent=11 // pred_region
          %240 = vsyncadd [#allocation8], 0
          %s241 = sshll.u32 %s2, 4
          %s242 = int_to_ptr.hbm [resolvable:$true] %s241
          %s243 = sshll.u32 [#allocation9], 4
          %s244 = int_to_ptr.vmem [resolvable:$true] %s243
          %249 = dma.hbm_to_vmem [thread:$0]  %s242, 2048, %s244, [#allocation8], 128, 128, 8
        $region16: #{tpu_custom_call.1} parent=11 // pred_fallthru
          _
        // Predicated region
        $region17: #{tpu_custom_call.1} parent=11 // pred_check
          %p250 = pneg %p147
        $region18: #{tpu_custom_call.1} parent=11 // pred_check_branch
          %252 = sbr.rel (%p250) target = $region20
        $region19: #{tpu_custom_call.1} parent=11 // pred_region
          %254 = vsyncadd [#allocation11], 0
          %s255 = sshll.u32 %s3, 4
          %s256 = int_to_ptr.hbm [resolvable:$true] %s255
          %s257 = sshll.u32 [#allocation10], 4
          %s258 = int_to_ptr.vmem [resolvable:$true] %s257
          %263 = dma.hbm_to_vmem [thread:$0]  %s256, 2048, %s258, [#allocation11], 128, 128, 8
        $region20: #{tpu_custom_call.1} parent=11 // pred_fallthru
          _
        // Predicated region
        $region21: #{tpu_custom_call.1} parent=11 // pred_check
          %p264 = pneg %p168
        $region22: #{tpu_custom_call.1} parent=11 // pred_check_branch
          %266 = sbr.rel (%p264) target = $region24
        $region23: #{tpu_custom_call.1} parent=11 // pred_region
          %268 = vsyncadd [#allocation11], 0
          %s270 = sshll.u32 %s4, 4
          %s271 = int_to_ptr.hbm [resolvable:$true] %s270
          %s272 = sshll.u32 [#allocation12], 4
          %s273 = int_to_ptr.vmem [resolvable:$true] %s272
          %275 = dma.hbm_to_vmem [thread:$0]  %s271, 16, %s273, [#allocation11]
        $region24: #{tpu_custom_call.1} parent=11 // pred_fallthru
          _
        // Predicated region
        $region25: #{tpu_custom_call.1} parent=11 // pred_check
          %p276 = pneg %p189
        $region26: #{tpu_custom_call.1} parent=11 // pred_check_branch
          %278 = sbr.rel (%p276) target = $region28
        $region27: #{tpu_custom_call.1} parent=11 // pred_region
          %280 = vsyncadd [#allocation14], 0
          %s281 = sshll.u32 %s5, 4
          %s282 = int_to_ptr.hbm [resolvable:$true] %s281
          %s283 = sshll.u32 [#allocation13], 4
          %s284 = int_to_ptr.vmem [resolvable:$true] %s283
          %289 = dma.hbm_to_vmem [thread:$0]  %s282, 8192, %s284, [#allocation14], 512, 512, 32
        $region28: #{tpu_custom_call.1} parent=11 // pred_fallthru
          _
      $region12: #{tpu_custom_call.1} parent=5 // pred_fallthru
        _
      %p290 = scmp.lt.s32.totalorder %s23, 16
      // Predicated region
      $region29: #{tpu_custom_call.1} parent=5 // pred_check
        %p291 = pneg %p290
      $region30: #{tpu_custom_call.1} parent=5 // pred_check_branch
        %293 = sbr.rel (%p291) target = $region32
      $region31: #{tpu_custom_call.1} parent=5 // pred_region
        // Predicated region
        $region33: #{tpu_custom_call.1} parent=31 // pred_check
          %p294 = pneg %p71
        $region34: #{tpu_custom_call.1} parent=31 // pred_check_branch
          %296 = sbr.rel (%p294) target = $region36
        $region35: #{tpu_custom_call.1} parent=31 // pred_region
          %s297 = sand.u32 %s61, 1
          %s298 = scalar_lea.sflag [#allocation5], %s297
          %s299 = sand.u32 %s61, 1
          %s300 = smul.addr %s299, 16
          %s301 = scalar_lea.vmem [#allocation4], %s300
          %s302 = smul.u32 2, %s31
          %304 = vsyncadd %s298, 0
          %s305 = smul.addr %s30, 4
          %s306 = sadd.s32 %s302, %s305
          %s307 = smul.addr %s306, 8
          %s308 = scalar_lea.hbm %s0, %s307
          %s309 = sshll.u32 %s308, 4
          %s310 = int_to_ptr.hbm [resolvable:$true] %s309
          %s311 = sshll.u32 %s301, 4
          %s312 = int_to_ptr.vmem [resolvable:$true] %s311
          %317 = dma.hbm_to_vmem [thread:$0]  %s310, 256, %s312, %s298, 128, 128, 8
        $region36: #{tpu_custom_call.1} parent=31 // pred_fallthru
          _
        // Predicated region
        $region37: #{tpu_custom_call.1} parent=31 // pred_check
          %p318 = pneg %p99
        $region38: #{tpu_custom_call.1} parent=31 // pred_check_branch
          %320 = sbr.rel (%p318) target = $region40
        $region39: #{tpu_custom_call.1} parent=31 // pred_region
          %s321 = sand.u32 %s23, 1
          %s322 = scalar_lea.sflag [#allocation8], %s321
          %s323 = sand.u32 %s89, 1
          %s324 = smul.addr %s323, 16
          %s325 = scalar_lea.vmem [#allocation7], %s324
          %s326 = smul.u32 2, %s32
          %328 = vsyncadd %s322, 0
          %s329 = smul.addr %s30, 4
          %s330 = sadd.s32 %s326, %s329
          %s331 = smul.addr %s330, 8
          %s332 = scalar_lea.hbm %s1, %s331
          %s333 = sshll.u32 %s332, 4
          %s334 = int_to_ptr.hbm [resolvable:$true] %s333
          %s335 = sshll.u32 %s325, 4
          %s336 = int_to_ptr.vmem [resolvable:$true] %s335
          %341 = dma.hbm_to_vmem [thread:$0]  %s334, 256, %s336, %s322, 128, 128, 8
        $region40: #{tpu_custom_call.1} parent=31 // pred_fallthru
          _
      $region32: #{tpu_custom_call.1} parent=5 // pred_fallthru
        _
      %p342 = scmp.le.s32.totalorder 1, %s23
      %p343 = scmp.lt.s32.totalorder %s23, 17
      %p344 = pnand %p342, %p343
      %p345 = pneg %p344
      // Predicated region
      $region41: #{tpu_custom_call.1} parent=5 // pred_check
        _
      $region42: #{tpu_custom_call.1} parent=5 // pred_check_branch
        %347 = sbr.rel (%p344) target = $region44
      $region43: #{tpu_custom_call.1} parent=5 // pred_region
        %s348 = ssub.s32 %s23, 1
        %s349 = sand.u32 %s64, 1
        %s350 = scalar_lea.sflag [#allocation5], %s349
        %s351 = sand.u32 %s64, 1
        %s352 = smul.addr %s351, 16
        %s353 = scalar_lea.vmem [#allocation4], %s352
        // Predicated region
        $region45: #{tpu_custom_call.1} parent=43 // pred_check
          %p354 = pneg %p77
        $region46: #{tpu_custom_call.1} parent=43 // pred_check_branch
          %356 = sbr.rel (%p354) target = $region48
        $region47: #{tpu_custom_call.1} parent=43 // pred_region
          %358 = dma.done %s350, 256
        $region48: #{tpu_custom_call.1} parent=43 // pred_fallthru
          _
        %s359 = sand.u32 %s28, 1
        %s360 = scalar_lea.sflag [#allocation8], %s359
        %s361 = sand.u32 %s92, 1
        %s362 = smul.addr %s361, 16
        %s363 = scalar_lea.vmem [#allocation7], %s362
        // Predicated region
        $region49: #{tpu_custom_call.1} parent=43 // pred_check
          %p364 = pneg %p105
        $region50: #{tpu_custom_call.1} parent=43 // pred_check_branch
          %366 = sbr.rel (%p364) target = $region52
        $region51: #{tpu_custom_call.1} parent=43 // pred_region
          %368 = dma.done %s360, 256
        $region52: #{tpu_custom_call.1} parent=43 // pred_fallthru
          _
        // Predicated region
        $region53: #{tpu_custom_call.1} parent=43 // pred_check
          %p369 = pneg %p126
        $region54: #{tpu_custom_call.1} parent=43 // pred_check_branch
          %371 = sbr.rel (%p369) target = $region56
        $region55: #{tpu_custom_call.1} parent=43 // pred_region
          %373 = dma.done [#allocation8], 2048
        $region56: #{tpu_custom_call.1} parent=43 // pred_fallthru
          _
        // Predicated region
        $region57: #{tpu_custom_call.1} parent=43 // pred_check
          %p374 = pneg %p147
        $region58: #{tpu_custom_call.1} parent=43 // pred_check_branch
          %376 = sbr.rel (%p374) target = $region60
        $region59: #{tpu_custom_call.1} parent=43 // pred_region
          %378 = dma.done [#allocation11], 2048
        $region60: #{tpu_custom_call.1} parent=43 // pred_fallthru
          _
        // Predicated region
        $region61: #{tpu_custom_call.1} parent=43 // pred_check
          %p379 = pneg %p168
        $region62: #{tpu_custom_call.1} parent=43 // pred_check_branch
          %381 = sbr.rel (%p379) target = $region64
        $region63: #{tpu_custom_call.1} parent=43 // pred_region
          %383 = dma.done [#allocation11], 16
        $region64: #{tpu_custom_call.1} parent=43 // pred_fallthru
          _
        // Predicated region
        $region65: #{tpu_custom_call.1} parent=43 // pred_check
          %p384 = pneg %p189
        $region66: #{tpu_custom_call.1} parent=43 // pred_check_branch
          %386 = sbr.rel (%p384) target = $region68
        $region67: #{tpu_custom_call.1} parent=43 // pred_region
          %388 = dma.done [#allocation14], 8192
        $region68: #{tpu_custom_call.1} parent=43 // pred_fallthru
          _
        %s389 = sand.u32 %s64, 1
        %s390 = scalar_lea.sflag [#allocation5], %s389
        %s391 = sand.u32 %s64, 1
        %s392 = smul.addr %s391, 16
        %s393 = scalar_lea.vmem [#allocation4], %s392
        %p394 = pneg %p77
        %p395 = pneg %p74
        %s396 = sand.u32 %s28, 1
        %s397 = scalar_lea.sflag [#allocation8], %s396
        %s398 = sand.u32 %s92, 1
        %s399 = smul.addr %s398, 16
        %s400 = scalar_lea.vmem [#allocation7], %s399
        %p401 = pneg %p105
        %p402 = pneg %p102
        %p403 = pneg %p126
        %p404 = pneg %p123
        %p405 = pneg %p147
        %p406 = pneg %p144
        %p407 = pneg %p168
        %p408 = pneg %p165
        %p409 = pneg %p189
        %p410 = pneg %p186
        %p411 = pneg %p221
        %p412 = pneg %p218
        %s413 = sand.u32 %s208, 1
        %s414 = scalar_lea.sflag [#allocation6], %s413
        %s415 = sand.u32 %s208, 1
        %s416 = smul.addr %s415, 512
        %s417 = scalar_lea.vmem [#allocation15], %s416
        %s418 = smul.u32 2, %s35
        %s419 = smul.u32 2, %s36
        %s420 = smul.u32 16, %s35
        %s421 = smul.u32 2, %s36
        %s422 = smul.u32 2, %s37
        %p423 = scmp.eq.s32.totalorder %s36, 0
        %p424 = scmp.eq.s32.totalorder %s37, 0
        %p425 = pnand %p423, %p424
        %p426 = pneg %p425
        // Predicated region
        $region69: #{tpu_custom_call.1} parent=43 // pred_check
          _
        $region70: #{tpu_custom_call.1} parent=43 // pred_check_branch
          %428 = sbr.rel (%p425) target = $region72
        $region71: #{tpu_custom_call.1} parent=43 // pred_region
          %v429 = vld [vmem:[%s353] sm:$0xff]
          %v430 = vld [vmem:[%s353 + $0x8] sm:$0xff]
          %v431 = vld [vmem:[#allocation9] sm:$0xff]
          %v432 = vld [vmem:[#allocation9 + $0x8] sm:$0xff]
          %v433 = vld [vmem:[#allocation9 + $0x10] sm:$0xff]
          %v434 = vld [vmem:[#allocation9 + $0x18] sm:$0xff]
          %v435 = vld [vmem:[#allocation9 + $0x20] sm:$0xff]
          %v436 = vld [vmem:[#allocation9 + $0x28] sm:$0xff]
          %v437 = vld [vmem:[#allocation9 + $0x30] sm:$0xff]
          %v438 = vld [vmem:[#allocation9 + $0x38] sm:$0xff]
          %v439 = vld [vmem:[#allocation9 + $0x40] sm:$0xff]
          %v440 = vld [vmem:[#allocation9 + $0x48] sm:$0xff]
          %v441 = vld [vmem:[#allocation9 + $0x50] sm:$0xff]
          %v442 = vld [vmem:[#allocation9 + $0x58] sm:$0xff]
          %v443 = vld [vmem:[#allocation9 + $0x60] sm:$0xff]
          %v444 = vld [vmem:[#allocation9 + $0x68] sm:$0xff]
          %v445 = vld [vmem:[#allocation9 + $0x70] sm:$0xff]
          %v446 = vld [vmem:[#allocation9 + $0x78] sm:$0xff]
          %447 = vmatpush.msra.mxu0 %v446
          %448 = vmatpush.msra.mxu0 %v445
          %449 = vmatpush.msra.mxu0 %v444
          %450 = vmatpush.msra.mxu0 %v443
          %451 = vmatpush.msra.mxu0 %v442
          %452 = vmatpush.msra.mxu0 %v441
          %453 = vmatpush.msra.mxu0 %v440
          %454 = vmatpush.msra.mxu0 %v439
          %455 = vmatpush.msra.mxu0 %v438
          %456 = vmatpush.msra.mxu0 %v437
          %457 = vmatpush.msra.mxu0 %v436
          %458 = vmatpush.msra.mxu0 %v435
          %459 = vmatpush.msra.mxu0 %v434
          %460 = vmatpush.msra.mxu0 %v433
          %461 = vmatpush.msra.mxu0 %v432
          %462 = vmatpush.msra.mxu0 %v431
          %463 = vmatmul.f32.gmra.mxu0 %v429
          %v464 = vpop.f32.mrf.mxu0
          %v465 = vadd.f32 0.0, %v464
          %466 = vmatmul.f32.gmra.mxu0 %v430
          %v467 = vpop.f32.mrf.mxu0
          %v468 = vadd.f32 0.0, %v467
          %469 = vdwg.mxu0
          %470 = vst [vmem:[#allocation2] sm:$0xff] %v465
          %471 = vst [vmem:[#allocation2 + $0x8] sm:$0xff] %v468
        $region72: #{tpu_custom_call.1} parent=43 // pred_fallthru
          _
        // Predicated region
        $region73: #{tpu_custom_call.1} parent=43 // pred_check
          %p472 = pneg %p424
        $region74: #{tpu_custom_call.1} parent=43 // pred_check_branch
          %474 = sbr.rel (%p472) target = $region76
        $region75: #{tpu_custom_call.1} parent=43 // pred_region
          %v475 = vld [vmem:[%s363] sm:$0xff]
          %v476 = vld [vmem:[%s363 + $0x8] sm:$0xff]
          %v477 = vld [vmem:[#allocation10] sm:$0xff]
          %v478 = vld [vmem:[#allocation10 + $0x8] sm:$0xff]
          %v479 = vld [vmem:[#allocation10 + $0x10] sm:$0xff]
          %v480 = vld [vmem:[#allocation10 + $0x18] sm:$0xff]
          %v481 = vld [vmem:[#allocation10 + $0x20] sm:$0xff]
          %v482 = vld [vmem:[#allocation10 + $0x28] sm:$0xff]
          %v483 = vld [vmem:[#allocation10 + $0x30] sm:$0xff]
          %v484 = vld [vmem:[#allocation10 + $0x38] sm:$0xff]
          %v485 = vld [vmem:[#allocation10 + $0x40] sm:$0xff]
          %v486 = vld [vmem:[#allocation10 + $0x48] sm:$0xff]
          %v487 = vld [vmem:[#allocation10 + $0x50] sm:$0xff]
          %v488 = vld [vmem:[#allocation10 + $0x58] sm:$0xff]
          %v489 = vld [vmem:[#allocation10 + $0x60] sm:$0xff]
          %v490 = vld [vmem:[#allocation10 + $0x68] sm:$0xff]
          %v491 = vld [vmem:[#allocation10 + $0x70] sm:$0xff]
          %v492 = vld [vmem:[#allocation10 + $0x78] sm:$0xff]
          %v493 = vld [vmem:[#allocation12] sm:$0x1]
          %v495 = vperm.slane %v493, 0
          %497 = vmatpush.msra.mxu0 %v492
          %498 = vmatpush.msra.mxu0 %v491
          %499 = vmatpush.msra.mxu0 %v490
          %500 = vmatpush.msra.mxu0 %v489
          %501 = vmatpush.msra.mxu0 %v488
          %502 = vmatpush.msra.mxu0 %v487
          %503 = vmatpush.msra.mxu0 %v486
          %504 = vmatpush.msra.mxu0 %v485
          %505 = vmatpush.msra.mxu0 %v484
          %506 = vmatpush.msra.mxu0 %v483
          %507 = vmatpush.msra.mxu0 %v482
          %508 = vmatpush.msra.mxu0 %v481
          %509 = vmatpush.msra.mxu0 %v480
          %510 = vmatpush.msra.mxu0 %v479
          %511 = vmatpush.msra.mxu0 %v478
          %512 = vmatpush.msra.mxu0 %v477
          %513 = vmatmul.f32.gmra.mxu0 %v475
          %v514 = vpop.f32.mrf.mxu0
          %v515 = vadd.f32 %v495, %v514
          %516 = vmatmul.f32.gmra.mxu0 %v476
          %v517 = vpop.f32.mrf.mxu0
          %v518 = vadd.f32 %v495, %v517
          %519 = vdwg.mxu0
          %v520 = vld [vmem:[#allocation2] sm:$0xff]
          %v521 = vld [vmem:[#allocation2 + $0x8] sm:$0xff]
          %v524 = vrot.slane %v520, 1
          %v525 = vrot.slane %v520, 2
          %v526 = vrot.slane %v520, 3
          %v527 = vrot.slane %v520, 4
          %v528 = vrot.slane %v520, 5
          %v529 = vrot.slane %v520, 6
          %v530 = vrot.slane %v520, 7
          %v531 = vrot.slane %v521, 1
          %v532 = vrot.slane %v521, 2
          %v533 = vrot.slane %v521, 3
          %v534 = vrot.slane %v521, 4
          %v535 = vrot.slane %v521, 5
          %v536 = vrot.slane %v521, 6
          %v537 = vrot.slane %v521, 7
          %v538 = vperm.slane %v520, 0
          %v539 = vperm.slane %v524, 0
          %v540 = vperm.slane %v525, 0
          %v541 = vperm.slane %v526, 0
          %v542 = vperm.slane %v527, 0
          %v543 = vperm.slane %v528, 0
          %v544 = vperm.slane %v529, 0
          %v545 = vperm.slane %v530, 0
          %v546 = vperm.slane %v521, 0
          %v547 = vperm.slane %v531, 0
          %v548 = vperm.slane %v532, 0
          %v549 = vperm.slane %v533, 0
          %v550 = vperm.slane %v534, 0
          %v551 = vperm.slane %v535, 0
          %v552 = vperm.slane %v536, 0
          %v553 = vperm.slane %v537, 0
          %v570 = vadd.f32 %v538, %v515
          %v571 = vadd.f32 %v538, %v518
          %v572 = vadd.f32 %v539, %v515
          %v573 = vadd.f32 %v539, %v518
          %v574 = vadd.f32 %v540, %v515
          %v575 = vadd.f32 %v540, %v518
          %v576 = vadd.f32 %v541, %v515
          %v577 = vadd.f32 %v541, %v518
          %v578 = vadd.f32 %v542, %v515
          %v579 = vadd.f32 %v542, %v518
          %v580 = vadd.f32 %v543, %v515
          %v581 = vadd.f32 %v543, %v518
          %v582 = vadd.f32 %v544, %v515
          %v583 = vadd.f32 %v544, %v518
          %v584 = vadd.f32 %v545, %v515
          %v585 = vadd.f32 %v545, %v518
          %v586 = vadd.f32 %v546, %v515
          %v587 = vadd.f32 %v546, %v518
          %v588 = vadd.f32 %v547, %v515
          %v589 = vadd.f32 %v547, %v518
          %v590 = vadd.f32 %v548, %v515
          %v591 = vadd.f32 %v548, %v518
          %v592 = vadd.f32 %v549, %v515
          %v593 = vadd.f32 %v549, %v518
          %v594 = vadd.f32 %v550, %v515
          %v595 = vadd.f32 %v550, %v518
          %v596 = vadd.f32 %v551, %v515
          %v597 = vadd.f32 %v551, %v518
          %v598 = vadd.f32 %v552, %v515
          %v599 = vadd.f32 %v552, %v518
          %v600 = vadd.f32 %v553, %v515
          %v601 = vadd.f32 %v553, %v518
          %v602 = vtanh.pop %v570
          %v603 = vtanh.pop %v571
          %v604 = vtanh.pop %v572
          %v605 = vtanh.pop %v573
          %v606 = vtanh.pop %v574
          %v607 = vtanh.pop %v575
          %v608 = vtanh.pop %v576
          %v609 = vtanh.pop %v577
          %v610 = vtanh.pop %v578
          %v611 = vtanh.pop %v579
          %v612 = vtanh.pop %v580
          %v613 = vtanh.pop %v581
          %v614 = vtanh.pop %v582
          %v615 = vtanh.pop %v583
          %v616 = vtanh.pop %v584
          %v617 = vtanh.pop %v585
          %v618 = vtanh.pop %v586
          %v619 = vtanh.pop %v587
          %v620 = vtanh.pop %v588
          %v621 = vtanh.pop %v589
          %v622 = vtanh.pop %v590
          %v623 = vtanh.pop %v591
          %v624 = vtanh.pop %v592
          %v625 = vtanh.pop %v593
          %v626 = vtanh.pop %v594
          %v627 = vtanh.pop %v595
          %v628 = vtanh.pop %v596
          %v629 = vtanh.pop %v597
          %v630 = vtanh.pop %v598
          %v631 = vtanh.pop %v599
          %v632 = vtanh.pop %v600
          %v633 = vtanh.pop %v601
          %634 = vst [vmem:[#allocation3] sm:$0xff] %v602
          %635 = vst [vmem:[#allocation3 + $0x8] sm:$0xff] %v603
          %636 = vst [vmem:[#allocation3 + $0x10] sm:$0xff] %v604
          %637 = vst [vmem:[#allocation3 + $0x18] sm:$0xff] %v605
          %638 = vst [vmem:[#allocation3 + $0x20] sm:$0xff] %v606
          %639 = vst [vmem:[#allocation3 + $0x28] sm:$0xff] %v607
          %640 = vst [vmem:[#allocation3 + $0x30] sm:$0xff] %v608
          %641 = vst [vmem:[#allocation3 + $0x38] sm:$0xff] %v609
          %642 = vst [vmem:[#allocation3 + $0x40] sm:$0xff] %v610
          %643 = vst [vmem:[#allocation3 + $0x48] sm:$0xff] %v611
          %644 = vst [vmem:[#allocation3 + $0x50] sm:$0xff] %v612
          %645 = vst [vmem:[#allocation3 + $0x58] sm:$0xff] %v613
          %646 = vst [vmem:[#allocation3 + $0x60] sm:$0xff] %v614
          %647 = vst [vmem:[#allocation3 + $0x68] sm:$0xff] %v615
          %648 = vst [vmem:[#allocation3 + $0x70] sm:$0xff] %v616
          %649 = vst [vmem:[#allocation3 + $0x78] sm:$0xff] %v617
          %650 = vst [vmem:[#allocation3 + $0x80] sm:$0xff] %v618
          %651 = vst [vmem:[#allocation3 + $0x88] sm:$0xff] %v619
          %652 = vst [vmem:[#allocation3 + $0x90] sm:$0xff] %v620
          %653 = vst [vmem:[#allocation3 + $0x98] sm:$0xff] %v621
          %654 = vst [vmem:[#allocation3 + $0xa0] sm:$0xff] %v622
          %655 = vst [vmem:[#allocation3 + $0xa8] sm:$0xff] %v623
          %656 = vst [vmem:[#allocation3 + $0xb0] sm:$0xff] %v624
          %657 = vst [vmem:[#allocation3 + $0xb8] sm:$0xff] %v625
          %658 = vst [vmem:[#allocation3 + $0xc0] sm:$0xff] %v626
          %659 = vst [vmem:[#allocation3 + $0xc8] sm:$0xff] %v627
          %660 = vst [vmem:[#allocation3 + $0xd0] sm:$0xff] %v628
          %661 = vst [vmem:[#allocation3 + $0xd8] sm:$0xff] %v629
          %662 = vst [vmem:[#allocation3 + $0xe0] sm:$0xff] %v630
          %663 = vst [vmem:[#allocation3 + $0xe8] sm:$0xff] %v631
          %664 = vst [vmem:[#allocation3 + $0xf0] sm:$0xff] %v632
          %665 = vst [vmem:[#allocation3 + $0xf8] sm:$0xff] %v633
        $region76: #{tpu_custom_call.1} parent=43 // pred_fallthru
          _
        %s666 = smul.u32 %s37, 256
        %s667 = sshra.s32 %s666, 7
        %s668 = sand.u32 %s666, 127
        %s669 = smul.addr %s667, 8
        %s670 = scalar_lea.vmem [#allocation13], %s669
        %v671 = vld [vmem:[%s670] sm:$0xff]
        %v672 = vld [vmem:[%s670 + $0x8] sm:$0xff]
        %v673 = vld [vmem:[%s670 + $0x20] sm:$0xff]
        %v674 = vld [vmem:[%s670 + $0x28] sm:$0xff]
        %v675 = vld [vmem:[%s670 + $0x40] sm:$0xff]
        %v676 = vld [vmem:[%s670 + $0x48] sm:$0xff]
        %v677 = vld [vmem:[%s670 + $0x60] sm:$0xff]
        %v678 = vld [vmem:[%s670 + $0x68] sm:$0xff]
        %v679 = vld [vmem:[%s670 + $0x80] sm:$0xff]
        %v680 = vld [vmem:[%s670 + $0x88] sm:$0xff]
        %v681 = vld [vmem:[%s670 + $0xa0] sm:$0xff]
        %v682 = vld [vmem:[%s670 + $0xa8] sm:$0xff]
        %v683 = vld [vmem:[%s670 + $0xc0] sm:$0xff]
        %v684 = vld [vmem:[%s670 + $0xc8] sm:$0xff]
        %v685 = vld [vmem:[%s670 + $0xe0] sm:$0xff]
        %v686 = vld [vmem:[%s670 + $0xe8] sm:$0xff]
        %v687 = vld [vmem:[%s670 + $0x100] sm:$0xff]
        %v688 = vld [vmem:[%s670 + $0x108] sm:$0xff]
        %v689 = vld [vmem:[%s670 + $0x120] sm:$0xff]
        %v690 = vld [vmem:[%s670 + $0x128] sm:$0xff]
        %v691 = vld [vmem:[%s670 + $0x140] sm:$0xff]
        %v692 = vld [vmem:[%s670 + $0x148] sm:$0xff]
        %v693 = vld [vmem:[%s670 + $0x160] sm:$0xff]
        %v694 = vld [vmem:[%s670 + $0x168] sm:$0xff]
        %v695 = vld [vmem:[%s670 + $0x180] sm:$0xff]
        %v696 = vld [vmem:[%s670 + $0x188] sm:$0xff]
        %v697 = vld [vmem:[%s670 + $0x1a0] sm:$0xff]
        %v698 = vld [vmem:[%s670 + $0x1a8] sm:$0xff]
        %v699 = vld [vmem:[%s670 + $0x1c0] sm:$0xff]
        %v700 = vld [vmem:[%s670 + $0x1c8] sm:$0xff]
        %v701 = vld [vmem:[%s670 + $0x1e0] sm:$0xff]
        %v702 = vld [vmem:[%s670 + $0x1e8] sm:$0xff]
        %v703 = vld [vmem:[#allocation3] sm:$0xff]
        %v704 = vld [vmem:[#allocation3 + $0x8] sm:$0xff]
        %v705 = vld [vmem:[#allocation3 + $0x10] sm:$0xff]
        %v706 = vld [vmem:[#allocation3 + $0x18] sm:$0xff]
        %v707 = vld [vmem:[#allocation3 + $0x20] sm:$0xff]
        %v708 = vld [vmem:[#allocation3 + $0x28] sm:$0xff]
        %v709 = vld [vmem:[#allocation3 + $0x30] sm:$0xff]
        %v710 = vld [vmem:[#allocation3 + $0x38] sm:$0xff]
        %v711 = vld [vmem:[#allocation3 + $0x40] sm:$0xff]
        %v712 = vld [vmem:[#allocation3 + $0x48] sm:$0xff]
        %v713 = vld [vmem:[#allocation3 + $0x50] sm:$0xff]
        %v714 = vld [vmem:[#allocation3 + $0x58] sm:$0xff]
        %v715 = vld [vmem:[#allocation3 + $0x60] sm:$0xff]
        %v716 = vld [vmem:[#allocation3 + $0x68] sm:$0xff]
        %v717 = vld [vmem:[#allocation3 + $0x70] sm:$0xff]
        %v718 = vld [vmem:[#allocation3 + $0x78] sm:$0xff]
        %v719 = vld [vmem:[#allocation3 + $0x80] sm:$0xff]
        %v720 = vld [vmem:[#allocation3 + $0x88] sm:$0xff]
        %v721 = vld [vmem:[#allocation3 + $0x90] sm:$0xff]
        %v722 = vld [vmem:[#allocation3 + $0x98] sm:$0xff]
        %v723 = vld [vmem:[#allocation3 + $0xa0] sm:$0xff]
        %v724 = vld [vmem:[#allocation3 + $0xa8] sm:$0xff]
        %v725 = vld [vmem:[#allocation3 + $0xb0] sm:$0xff]
        %v726 = vld [vmem:[#allocation3 + $0xb8] sm:$0xff]
        %v727 = vld [vmem:[#allocation3 + $0xc0] sm:$0xff]
        %v728 = vld [vmem:[#allocation3 + $0xc8] sm:$0xff]
        %v729 = vld [vmem:[#allocation3 + $0xd0] sm:$0xff]
        %v730 = vld [vmem:[#allocation3 + $0xd8] sm:$0xff]
        %v731 = vld [vmem:[#allocation3 + $0xe0] sm:$0xff]
        %v732 = vld [vmem:[#allocation3 + $0xe8] sm:$0xff]
        %v733 = vld [vmem:[#allocation3 + $0xf0] sm:$0xff]
        %v734 = vld [vmem:[#allocation3 + $0xf8] sm:$0xff]
        %735 = vmatpush.msra.mxu0 %v701
        %736 = vmatpush.msra.mxu0 %v699
        %737 = vmatpush.msra.mxu0 %v697
        %738 = vmatpush.msra.mxu0 %v695
        %739 = vmatpush.msra.mxu0 %v693
        %740 = vmatpush.msra.mxu0 %v691
        %741 = vmatpush.msra.mxu0 %v689
        %742 = vmatpush.msra.mxu0 %v687
        %743 = vmatpush.msra.mxu0 %v685
        %744 = vmatpush.msra.mxu0 %v683
        %745 = vmatpush.msra.mxu0 %v681
        %746 = vmatpush.msra.mxu0 %v679
        %747 = vmatpush.msra.mxu0 %v677
        %748 = vmatpush.msra.mxu0 %v675
        %749 = vmatpush.msra.mxu0 %v673
        %750 = vmatpush.msra.mxu0 %v671
        %751 = vmatmul.f32.gmra.mxu0 %v703
        %v752 = vpop.f32.mrf.mxu0
        %v753 = vadd.f32 0.0, %v752
        %754 = vmatmul.f32.gmra.mxu0 %v704
        %v755 = vpop.f32.mrf.mxu0
        %v756 = vadd.f32 0.0, %v755
        %757 = vmatmul.f32.gmra.mxu0 %v705
        %v758 = vpop.f32.mrf.mxu0
        %v759 = vadd.f32 0.0, %v758
        %760 = vmatmul.f32.gmra.mxu0 %v706
        %v761 = vpop.f32.mrf.mxu0
        %v762 = vadd.f32 0.0, %v761
        %763 = vmatmul.f32.gmra.mxu0 %v707
        %v764 = vpop.f32.mrf.mxu0
        %v765 = vadd.f32 0.0, %v764
        %766 = vmatmul.f32.gmra.mxu0 %v708
        %v767 = vpop.f32.mrf.mxu0
        %v768 = vadd.f32 0.0, %v767
        %769 = vmatmul.f32.gmra.mxu0 %v709
        %v770 = vpop.f32.mrf.mxu0
        %v771 = vadd.f32 0.0, %v770
        %772 = vmatmul.f32.gmra.mxu0 %v710
        %v773 = vpop.f32.mrf.mxu0
        %v774 = vadd.f32 0.0, %v773
        %775 = vmatmul.f32.gmra.mxu0 %v711
        %v776 = vpop.f32.mrf.mxu0
        %v777 = vadd.f32 0.0, %v776
        %778 = vmatmul.f32.gmra.mxu0 %v712
        %v779 = vpop.f32.mrf.mxu0
        %v780 = vadd.f32 0.0, %v779
        %781 = vmatmul.f32.gmra.mxu0 %v713
        %v782 = vpop.f32.mrf.mxu0
        %v783 = vadd.f32 0.0, %v782
        %784 = vmatmul.f32.gmra.mxu0 %v714
        %v785 = vpop.f32.mrf.mxu0
        %v786 = vadd.f32 0.0, %v785
        %787 = vmatmul.f32.gmra.mxu0 %v715
        %v788 = vpop.f32.mrf.mxu0
        %v789 = vadd.f32 0.0, %v788
        %790 = vmatmul.f32.gmra.mxu0 %v716
        %v791 = vpop.f32.mrf.mxu0
        %v792 = vadd.f32 0.0, %v791
        %793 = vmatmul.f32.gmra.mxu0 %v717
        %v794 = vpop.f32.mrf.mxu0
        %v795 = vadd.f32 0.0, %v794
        %796 = vmatmul.f32.gmra.mxu0 %v718
        %v797 = vpop.f32.mrf.mxu0
        %v798 = vadd.f32 0.0, %v797
        %799 = vmatmul.f32.gmra.mxu0 %v719
        %v800 = vpop.f32.mrf.mxu0
        %v801 = vadd.f32 0.0, %v800
        %802 = vmatmul.f32.gmra.mxu0 %v720
        %v803 = vpop.f32.mrf.mxu0
        %v804 = vadd.f32 0.0, %v803
        %805 = vmatmul.f32.gmra.mxu0 %v721
        %v806 = vpop.f32.mrf.mxu0
        %v807 = vadd.f32 0.0, %v806
        %808 = vmatmul.f32.gmra.mxu0 %v722
        %v809 = vpop.f32.mrf.mxu0
        %v810 = vadd.f32 0.0, %v809
        %811 = vmatmul.f32.gmra.mxu0 %v723
        %v812 = vpop.f32.mrf.mxu0
        %v813 = vadd.f32 0.0, %v812
        %814 = vmatmul.f32.gmra.mxu0 %v724
        %v815 = vpop.f32.mrf.mxu0
        %v816 = vadd.f32 0.0, %v815
        %817 = vmatmul.f32.gmra.mxu0 %v725
        %v818 = vpop.f32.mrf.mxu0
        %v819 = vadd.f32 0.0, %v818
        %820 = vmatmul.f32.gmra.mxu0 %v726
        %v821 = vpop.f32.mrf.mxu0
        %v822 = vadd.f32 0.0, %v821
        %823 = vmatmul.f32.gmra.mxu0 %v727
        %v824 = vpop.f32.mrf.mxu0
        %v825 = vadd.f32 0.0, %v824
        %826 = vmatmul.f32.gmra.mxu0 %v728
        %v827 = vpop.f32.mrf.mxu0
        %v828 = vadd.f32 0.0, %v827
        %829 = vmatmul.f32.gmra.mxu0 %v729
        %v830 = vpop.f32.mrf.mxu0
        %v831 = vadd.f32 0.0, %v830
        %832 = vmatmul.f32.gmra.mxu0 %v730
        %v833 = vpop.f32.mrf.mxu0
        %v834 = vadd.f32 0.0, %v833
        %835 = vmatmul.f32.gmra.mxu0 %v731
        %v836 = vpop.f32.mrf.mxu0
        %v837 = vadd.f32 0.0, %v836
        %838 = vmatmul.f32.gmra.mxu0 %v732
        %v839 = vpop.f32.mrf.mxu0
        %v840 = vadd.f32 0.0, %v839
        %841 = vmatmul.f32.gmra.mxu0 %v733
        %v842 = vpop.f32.mrf.mxu0
        %v843 = vadd.f32 0.0, %v842
        %844 = vmatmul.f32.gmra.mxu0 %v734
        %v845 = vpop.f32.mrf.mxu0
        %v846 = vadd.f32 0.0, %v845
        %847 = vdwg.mxu0
        %848 = vmatpush.msra.mxu0 %v702
        %849 = vmatpush.msra.mxu0 %v700
        %850 = vmatpush.msra.mxu0 %v698
        %851 = vmatpush.msra.mxu0 %v696
        %852 = vmatpush.msra.mxu0 %v694
        %853 = vmatpush.msra.mxu0 %v692
        %854 = vmatpush.msra.mxu0 %v690
        %855 = vmatpush.msra.mxu0 %v688
        %856 = vmatpush.msra.mxu0 %v686
        %857 = vmatpush.msra.mxu0 %v684
        %858 = vmatpush.msra.mxu0 %v682
        %859 = vmatpush.msra.mxu0 %v680
        %860 = vmatpush.msra.mxu0 %v678
        %861 = vmatpush.msra.mxu0 %v676
        %862 = vmatpush.msra.mxu0 %v674
        %863 = vmatpush.msra.mxu0 %v672
        %864 = vmatmul.f32.gmra.mxu0 %v703
        %v865 = vpop.f32.mrf.mxu0
        %v866 = vadd.f32 0.0, %v865
        %867 = vmatmul.f32.gmra.mxu0 %v704
        %v868 = vpop.f32.mrf.mxu0
        %v869 = vadd.f32 0.0, %v868
        %870 = vmatmul.f32.gmra.mxu0 %v705
        %v871 = vpop.f32.mrf.mxu0
        %v872 = vadd.f32 0.0, %v871
        %873 = vmatmul.f32.gmra.mxu0 %v706
        %v874 = vpop.f32.mrf.mxu0
        %v875 = vadd.f32 0.0, %v874
        %876 = vmatmul.f32.gmra.mxu0 %v707
        %v877 = vpop.f32.mrf.mxu0
        %v878 = vadd.f32 0.0, %v877
        %879 = vmatmul.f32.gmra.mxu0 %v708
        %v880 = vpop.f32.mrf.mxu0
        %v881 = vadd.f32 0.0, %v880
        %882 = vmatmul.f32.gmra.mxu0 %v709
        %v883 = vpop.f32.mrf.mxu0
        %v884 = vadd.f32 0.0, %v883
        %885 = vmatmul.f32.gmra.mxu0 %v710
        %v886 = vpop.f32.mrf.mxu0
        %v887 = vadd.f32 0.0, %v886
        %888 = vmatmul.f32.gmra.mxu0 %v711
        %v889 = vpop.f32.mrf.mxu0
        %v890 = vadd.f32 0.0, %v889
        %891 = vmatmul.f32.gmra.mxu0 %v712
        %v892 = vpop.f32.mrf.mxu0
        %v893 = vadd.f32 0.0, %v892
        %894 = vmatmul.f32.gmra.mxu0 %v713
        %v895 = vpop.f32.mrf.mxu0
        %v896 = vadd.f32 0.0, %v895
        %897 = vmatmul.f32.gmra.mxu0 %v714
        %v898 = vpop.f32.mrf.mxu0
        %v899 = vadd.f32 0.0, %v898
        %900 = vmatmul.f32.gmra.mxu0 %v715
        %v901 = vpop.f32.mrf.mxu0
        %v902 = vadd.f32 0.0, %v901
        %903 = vmatmul.f32.gmra.mxu0 %v716
        %v904 = vpop.f32.mrf.mxu0
        %v905 = vadd.f32 0.0, %v904
        %906 = vmatmul.f32.gmra.mxu0 %v717
        %v907 = vpop.f32.mrf.mxu0
        %v908 = vadd.f32 0.0, %v907
        %909 = vmatmul.f32.gmra.mxu0 %v718
        %v910 = vpop.f32.mrf.mxu0
        %v911 = vadd.f32 0.0, %v910
        %912 = vmatmul.f32.gmra.mxu0 %v719
        %v913 = vpop.f32.mrf.mxu0
        %v914 = vadd.f32 0.0, %v913
        %915 = vmatmul.f32.gmra.mxu0 %v720
        %v916 = vpop.f32.mrf.mxu0
        %v917 = vadd.f32 0.0, %v916
        %918 = vmatmul.f32.gmra.mxu0 %v721
        %v919 = vpop.f32.mrf.mxu0
        %v920 = vadd.f32 0.0, %v919
        %921 = vmatmul.f32.gmra.mxu0 %v722
        %v922 = vpop.f32.mrf.mxu0
        %v923 = vadd.f32 0.0, %v922
        %924 = vmatmul.f32.gmra.mxu0 %v723
        %v925 = vpop.f32.mrf.mxu0
        %v926 = vadd.f32 0.0, %v925
        %927 = vmatmul.f32.gmra.mxu0 %v724
        %v928 = vpop.f32.mrf.mxu0
        %v929 = vadd.f32 0.0, %v928
        %930 = vmatmul.f32.gmra.mxu0 %v725
        %v931 = vpop.f32.mrf.mxu0
        %v932 = vadd.f32 0.0, %v931
        %933 = vmatmul.f32.gmra.mxu0 %v726
        %v934 = vpop.f32.mrf.mxu0
        %v935 = vadd.f32 0.0, %v934
        %936 = vmatmul.f32.gmra.mxu0 %v727
        %v937 = vpop.f32.mrf.mxu0
        %v938 = vadd.f32 0.0, %v937
        %939 = vmatmul.f32.gmra.mxu0 %v728
        %v940 = vpop.f32.mrf.mxu0
        %v941 = vadd.f32 0.0, %v940
        %942 = vmatmul.f32.gmra.mxu0 %v729
        %v943 = vpop.f32.mrf.mxu0
        %v944 = vadd.f32 0.0, %v943
        %945 = vmatmul.f32.gmra.mxu0 %v730
        %v946 = vpop.f32.mrf.mxu0
        %v947 = vadd.f32 0.0, %v946
        %948 = vmatmul.f32.gmra.mxu0 %v731
        %v949 = vpop.f32.mrf.mxu0
        %v950 = vadd.f32 0.0, %v949
        %951 = vmatmul.f32.gmra.mxu0 %v732
        %v952 = vpop.f32.mrf.mxu0
        %v953 = vadd.f32 0.0, %v952
        %954 = vmatmul.f32.gmra.mxu0 %v733
        %v955 = vpop.f32.mrf.mxu0
        %v956 = vadd.f32 0.0, %v955
        %957 = vmatmul.f32.gmra.mxu0 %v734
        %v958 = vpop.f32.mrf.mxu0
        %v959 = vadd.f32 0.0, %v958
        %960 = vdwg.mxu0
        %961 = vst [vmem:[%s417] sm:$0xff] %v753
        %962 = vst [vmem:[%s417 + $0x8] sm:$0xff] %v866
        %963 = vst [vmem:[%s417 + $0x10] sm:$0xff] %v756
        %964 = vst [vmem:[%s417 + $0x18] sm:$0xff] %v869
        %965 = vst [vmem:[%s417 + $0x20] sm:$0xff] %v759
        %966 = vst [vmem:[%s417 + $0x28] sm:$0xff] %v872
        %967 = vst [vmem:[%s417 + $0x30] sm:$0xff] %v762
        %968 = vst [vmem:[%s417 + $0x38] sm:$0xff] %v875
        %969 = vst [vmem:[%s417 + $0x40] sm:$0xff] %v765
        %970 = vst [vmem:[%s417 + $0x48] sm:$0xff] %v878
        %971 = vst [vmem:[%s417 + $0x50] sm:$0xff] %v768
        %972 = vst [vmem:[%s417 + $0x58] sm:$0xff] %v881
        %973 = vst [vmem:[%s417 + $0x60] sm:$0xff] %v771
        %974 = vst [vmem:[%s417 + $0x68] sm:$0xff] %v884
        %975 = vst [vmem:[%s417 + $0x70] sm:$0xff] %v774
        %976 = vst [vmem:[%s417 + $0x78] sm:$0xff] %v887
        %977 = vst [vmem:[%s417 + $0x80] sm:$0xff] %v777
        %978 = vst [vmem:[%s417 + $0x88] sm:$0xff] %v890
        %979 = vst [vmem:[%s417 + $0x90] sm:$0xff] %v780
        %980 = vst [vmem:[%s417 + $0x98] sm:$0xff] %v893
        %981 = vst [vmem:[%s417 + $0xa0] sm:$0xff] %v783
        %982 = vst [vmem:[%s417 + $0xa8] sm:$0xff] %v896
        %983 = vst [vmem:[%s417 + $0xb0] sm:$0xff] %v786
        %984 = vst [vmem:[%s417 + $0xb8] sm:$0xff] %v899
        %985 = vst [vmem:[%s417 + $0xc0] sm:$0xff] %v789
        %986 = vst [vmem:[%s417 + $0xc8] sm:$0xff] %v902
        %987 = vst [vmem:[%s417 + $0xd0] sm:$0xff] %v792
        %988 = vst [vmem:[%s417 + $0xd8] sm:$0xff] %v905
        %989 = vst [vmem:[%s417 + $0xe0] sm:$0xff] %v795
        %990 = vst [vmem:[%s417 + $0xe8] sm:$0xff] %v908
        %991 = vst [vmem:[%s417 + $0xf0] sm:$0xff] %v798
        %992 = vst [vmem:[%s417 + $0xf8] sm:$0xff] %v911
        %993 = vst [vmem:[%s417 + $0x100] sm:$0xff] %v801
        %994 = vst [vmem:[%s417 + $0x108] sm:$0xff] %v914
        %995 = vst [vmem:[%s417 + $0x110] sm:$0xff] %v804
        %996 = vst [vmem:[%s417 + $0x118] sm:$0xff] %v917
        %997 = vst [vmem:[%s417 + $0x120] sm:$0xff] %v807
        %998 = vst [vmem:[%s417 + $0x128] sm:$0xff] %v920
        %999 = vst [vmem:[%s417 + $0x130] sm:$0xff] %v810
        %1000 = vst [vmem:[%s417 + $0x138] sm:$0xff] %v923
        %1001 = vst [vmem:[%s417 + $0x140] sm:$0xff] %v813
        %1002 = vst [vmem:[%s417 + $0x148] sm:$0xff] %v926
        %1003 = vst [vmem:[%s417 + $0x150] sm:$0xff] %v816
        %1004 = vst [vmem:[%s417 + $0x158] sm:$0xff] %v929
        %1005 = vst [vmem:[%s417 + $0x160] sm:$0xff] %v819
        %1006 = vst [vmem:[%s417 + $0x168] sm:$0xff] %v932
        %1007 = vst [vmem:[%s417 + $0x170] sm:$0xff] %v822
        %1008 = vst [vmem:[%s417 + $0x178] sm:$0xff] %v935
        %1009 = vst [vmem:[%s417 + $0x180] sm:$0xff] %v825
        %1010 = vst [vmem:[%s417 + $0x188] sm:$0xff] %v938
        %1011 = vst [vmem:[%s417 + $0x190] sm:$0xff] %v828
        %1012 = vst [vmem:[%s417 + $0x198] sm:$0xff] %v941
        %1013 = vst [vmem:[%s417 + $0x1a0] sm:$0xff] %v831
        %1014 = vst [vmem:[%s417 + $0x1a8] sm:$0xff] %v944
        %1015 = vst [vmem:[%s417 + $0x1b0] sm:$0xff] %v834
        %1016 = vst [vmem:[%s417 + $0x1b8] sm:$0xff] %v947
        %1017 = vst [vmem:[%s417 + $0x1c0] sm:$0xff] %v837
        %1018 = vst [vmem:[%s417 + $0x1c8] sm:$0xff] %v950
        %1019 = vst [vmem:[%s417 + $0x1d0] sm:$0xff] %v840
        %1020 = vst [vmem:[%s417 + $0x1d8] sm:$0xff] %v953
        %1021 = vst [vmem:[%s417 + $0x1e0] sm:$0xff] %v843
        %1022 = vst [vmem:[%s417 + $0x1e8] sm:$0xff] %v956
        %1023 = vst [vmem:[%s417 + $0x1f0] sm:$0xff] %v846
        %1024 = vst [vmem:[%s417 + $0x1f8] sm:$0xff] %v959
        %s1025 = sand.u32 %s208, 1
        %s1026 = scalar_lea.sflag [#allocation6], %s1025
        %s1027 = sand.u32 %s208, 1
        %s1028 = smul.addr %s1027, 512
        %s1029 = scalar_lea.vmem [#allocation15], %s1028
        // Predicated region
        $region77: #{tpu_custom_call.1} parent=43 // pred_check
          %p1030 = pneg %p218
        $region78: #{tpu_custom_call.1} parent=43 // pred_check_branch
          %1032 = sbr.rel (%p1030) target = $region80
        $region79: #{tpu_custom_call.1} parent=43 // pred_region
          #allocation17 [shape = 'u32[6]{0}', space=smem, size = 0x18, scoped, tag = 'DMA stride descriptor']
          %s1033 = smul.u32 16, %s35
          %s1034 = smul.u32 2, %s36
          %s1035 = smul.u32 2, %s37
          %1037 = vsyncadd %s1026, 0
          %s1038 = smul.addr %s1034, 4
          %s1039 = sadd.s32 %s1035, %s1038
          %s1040 = smul.addr %s1033, 16
          %s1041 = sadd.s32 %s1039, %s1040
          %s1042 = smul.addr %s34, 512
          %s1043 = sadd.s32 %s1041, %s1042
          %s1044 = smul.addr %s1043, 8
          %s1045 = scalar_lea.hbm %s6, %s1044
          %s1047 = sshll.u32 1, 14
          %s1048 = sxor.u32 4294967295, %s1047
          %s1051 = sshll.u32 7, 18
          %s1052 = sxor.u32 4294967295, %s1051
          %s1053 = sand.u32 0, %s1052
          %s1055 = sor.u32 %s1053, 0
          %s1056 = sshll.u32 %s1029, 4
          %s1057 = int_to_ptr.vmem [resolvable:$true] %s1056
          %s1058 = sshll.u32 %s1045, 4
          %s1059 = int_to_ptr.hbm [resolvable:$true] %s1058
          %1065 = sst [smem:[#allocation17]] 512
          %s1066 = scalar_lea.smem [#allocation17], 1
          %1067 = sst [smem:[%s1066]] 2048
          %s1068 = scalar_lea.smem [#allocation17], 2
          %1069 = sst [smem:[%s1068]] 2
          %s1070 = scalar_lea.smem [#allocation17], 3
          %1071 = sst [smem:[%s1070]] 256
          %s1072 = scalar_lea.smem [#allocation17], 4
          %1073 = sst [smem:[%s1072]] 512
          %s1074 = scalar_lea.smem [#allocation17], 5
          %1075 = sst [smem:[%s1074]] 16
          %1077 = dma.general %s1057, 8192, %s1059, %s1026, [#allocation16], [#allocation17], %s1055, 0
        $region80: #{tpu_custom_call.1} parent=43 // pred_fallthru
          _
      $region44: #{tpu_custom_call.1} parent=5 // pred_fallthru
        _
      %p1078 = scmp.le.s32.totalorder 2, %s23
      // Predicated region
      $region81: #{tpu_custom_call.1} parent=5 // pred_check
        %p1079 = pneg %p1078
      $region82: #{tpu_custom_call.1} parent=5 // pred_check_branch
        %1081 = sbr.rel (%p1079) target = $region84
      $region83: #{tpu_custom_call.1} parent=5 // pred_region
        %s1082 = ssub.s32 %s23, 2
        // Predicated region
        $region85: #{tpu_custom_call.1} parent=83 // pred_check
          %p1083 = pneg %p224
        $region86: #{tpu_custom_call.1} parent=83 // pred_check_branch
          %1085 = sbr.rel (%p1083) target = $region88
        $region87: #{tpu_custom_call.1} parent=83 // pred_region
          %s1086 = sand.u32 %s209, 1
          %s1087 = scalar_lea.sflag [#allocation6], %s1086
          %s1088 = sand.u32 %s209, 1
          %s1089 = smul.addr %s1088, 512
          %s1090 = scalar_lea.vmem [#allocation15], %s1089
          %1092 = dma.done %s1087, 8192
        $region88: #{tpu_custom_call.1} parent=83 // pred_fallthru
          _
      $region84: #{tpu_custom_call.1} parent=5 // pred_fallthru
        _
    $region6: #{tpu_custom_call.1} parent=1 // loop_footer
      %s27 = sadd.s32 1, %s23
    $region7: #{tpu_custom_call.1} parent=1 // loop_footer_branch
      %22 = sbr.rel target = $region3
    $region8: #{tpu_custom_call.1} parent=1 // loop_exit
      _
    %1093 = vsyncpa [#allocation5], 1
    %s1094 = scalar_lea.sflag [#allocation5], 1
    %1095 = vsyncpa %s1094, 1
    %1096 = vsyncpa [#allocation8], 1
    %s1097 = scalar_lea.sflag [#allocation8], 1
    %1098 = vsyncpa %s1097, 1
    %1099 = vsyncpa [#allocation11], 1
    %1100 = vsyncpa [#allocation14], 1
    %1101 = vsyncpa [#allocation6], 1
    %s1102 = scalar_lea.sflag [#allocation6], 1
    %1103 = vsyncpa %s1102, 1

</llo_original>
